<compile_context>
chip_gen: v6e
topology: v6e:2x2x1
jax: 0.10.0
libtpu: 0.0.40
codegen_flags: <defaults>
</compile_context>

<pallas_src>
import jax
import jax.numpy as jnp
from jax import lax
from jax.experimental import pallas as pl
from jax.experimental.pallas import tpu as pltpu


def _round_up(a, b):
    return (a + b - 1) // b * b


# ---------------------------------------------------------------------------
# Pallas kernel: out = relu(x_im2col @ W1) @ W2   (all biases / BN pre-folded)
# ---------------------------------------------------------------------------
def _multicnn_kernel(x_ref, w1_ref, w2_ref, out_ref):
    # x_ref  : (Mblk, KC+1)        im2col rows (+ ones column for conv bias)
    # w1_ref : (KC+1, Ctot+1)      unified conv taps (+ bias row, + 1-channel)
    # w2_ref : (Ctot+1, Osz_pad)   BN-folded Linear weight (+ bias row), lane-padded
    # out_ref: (Mblk, Osz_pad)
    h = jnp.dot(x_ref[...], w1_ref[...], preferred_element_type=jnp.float32)
    h = jnp.maximum(h, 0.0)                                    # ReLU(conv + bias)
    # Dropout: identity in eval mode.
    y = jnp.dot(h.astype(w2_ref.dtype), w2_ref[...],
                preferred_element_type=jnp.float32)
    out_ref[...] = y.astype(out_ref.dtype)


def multicnn_forward(x, params, convs_configs, eps=1e-5,
                     compute_dtype=jnp.float32, m_block=256):
    """x: (B, T, input_size) float32  ->  (B, T, output_size) float32."""
    B, T, Cin = x.shape
    for cfg in convs_configs:
        # PyTorch's torch.cat requires every branch to keep length T.
        assert 2 * cfg["padding"] == cfg["kernel_size"] - 1, (
            "MultiCNN requires 'same'-length convs (2*padding == kernel-1)")
    Pmax = max(cfg["padding"] for cfg in convs_configs)
    Kmax = 2 * Pmax + 1
    Ctot = sum(cfg["channel_size"] for cfg in convs_configs)
    Osz = params["wl"].shape[0]

    # --- glue (plain JAX): unified conv taps + concat biases ----------------
    wfull = jnp.zeros((Kmax, Cin, Ctot), jnp.float32)
    bias_all = jnp.zeros((Ctot,), jnp.float32)
    c_off = 0
    for cfg, w, b in zip(convs_configs, params["conv_w"], params["conv_b"]):
        K, P, C = cfg["kernel_size"], cfg["padding"], cfg["channel_size"]
        tap_off = Pmax - P
        for k in range(K):
            # w: (C_out, C_in, K)  ->  wfull[tap, C_in, C_out-slice]
            wfull = wfull.at[tap_off + k, :, c_off:c_off + C].set(w[:, :, k].T)
        bias_all = bias_all.at[c_off:c_off + C].set(b)
        c_off += C

    # --- fold BatchNorm1d (eval, running stats) into the output Linear ------
    scale = params["bn_gamma"] / jnp.sqrt(params["bn_var"] + eps)
    shift = params["bn_beta"] - params["bn_mean"] * scale
    wl_t = params["wl"].T                                  # (Ctot, Osz)
    wl_fold = scale[:, None] * wl_t                        # (Ctot, Osz)
    bl_fold = shift @ wl_t + params["bl"]                  # (Osz,)

    # --- im2col: one big matmul instead of Kmax shifted tiny matmuls --------
    xpad = jnp.pad(x, ((0, 0), (Pmax, Pmax), (0, 0)))      # (B, T+2Pmax, Cin)
    x_cat = jnp.concatenate([xpad[:, k:k + T, :] for k in range(Kmax)],
                            axis=-1)                       # (B, T, Kmax*Cin)
    KC = Kmax * Cin
    M = B * T
    x_cat = x_cat.reshape(M, KC)

    # ones column folds the conv bias into matmul #1; a synthetic always-one
    # conv channel (zero weights, bias 1, relu(1)=1) folds the folded Linear
    # bias into matmul #2 -> the kernel is two pure matmuls + ReLU.
    x_aug = jnp.concatenate([x_cat, jnp.ones((M, 1), jnp.float32)], axis=-1)

    w1 = wfull.reshape(KC, Ctot)
    w1_aug = jnp.zeros((KC + 1, Ctot + 1), jnp.float32)
    w1_aug = w1_aug.at[:KC, :Ctot].set(w1)
    w1_aug = w1_aug.at[KC, :Ctot].set(bias_all)
    w1_aug = w1_aug.at[KC, Ctot].set(1.0)

    Osz_pad = _round_up(Osz, 128)                          # lane-dense stores
    w2_aug = jnp.zeros((Ctot + 1, Osz_pad), jnp.float32)
    w2_aug = w2_aug.at[:Ctot, :Osz].set(wl_fold)
    w2_aug = w2_aug.at[Ctot, :Osz].set(bl_fold)

    # --- batch*time flattened into the matmul M dimension, tiled ------------
    Mblk = min(_round_up(M, 8), _round_up(m_block, 8))
    M_pad = _round_up(M, Mblk)
    x_aug = jnp.pad(x_aug, ((0, M_pad - M), (0, 0)))

    x_aug = x_aug.astype(compute_dtype)
    w1_aug = w1_aug.astype(compute_dtype)
    w2_aug = w2_aug.astype(compute_dtype)

    itemsize = jnp.dtype(compute_dtype).itemsize
    cost = pl.CostEstimate(
        flops=2 * M_pad * ((KC + 1) * (Ctot + 1) + (Ctot + 1) * Osz_pad),
        transcendentals=0,
        bytes_accessed=(M_pad * (KC + 1) + (KC + 1) * (Ctot + 1)
                        + (Ctot + 1) * Osz_pad) * itemsize
                       + M_pad * Osz_pad * 4)

    out = pl.pallas_call(
        _multicnn_kernel,
        out_shape=jax.ShapeDtypeStruct((M_pad, Osz_pad), jnp.float32),
        grid=(M_pad // Mblk,),
        in_specs=[
            pl.BlockSpec((Mblk, KC + 1), lambda i: (i, 0)),
            pl.BlockSpec((KC + 1, Ctot + 1), lambda i: (0, 0)),
            pl.BlockSpec((Ctot + 1, Osz_pad), lambda i: (0, 0)),
        ],
        out_specs=pl.BlockSpec((Mblk, Osz_pad), lambda i: (i, 0)),
        compiler_params=pltpu.CompilerParams(
            dimension_semantics=("parallel",)),
        cost_estimate=cost,
    )(x_aug, w1_aug, w2_aug)

    return out[:M, :Osz].reshape(B, T, Osz)


# ---------------------------------------------------------------------------
# Pure-JAX reference (mirrors PyTorch forward in eval mode)
# ---------------------------------------------------------------------------
def multicnn_reference(x, params, convs_configs, eps=1e-5):
    xT = jnp.swapaxes(x, -2, -1)                           # (B, Cin, T)
    outs = []
    for cfg, w, b in zip(convs_configs, params["conv_w"], params["conv_b"]):
        P = cfg["padding"]
        y = lax.conv_general_dilated(
            xT, w, window_strides=(1,), padding=[(P, P)],
            dimension_numbers=("NCH", "OIH", "NCH"))
        outs.append(jax.nn.relu(y + b[None, :, None]))
    h = jnp.concatenate(outs, axis=-2)                     # (B, Ctot, T)
    h = ((h - params["bn_mean"][None, :, None])
         / jnp.sqrt(params["bn_var"] + eps)[None, :, None]
         * params["bn_gamma"][None, :, None]
         + params["bn_beta"][None, :, None])
    h = jnp.swapaxes(h, -2, -1)                            # (B, T, Ctot)
    return h @ params["wl"].T + params["bl"]


# ---------------------------------------------------------------------------
def init_params(key, input_size, output_size, convs_configs):
    params = {"conv_w": [], "conv_b": []}
    for cfg in convs_configs:
        key, k1, k2 = jax.random.split(key, 3)
        C, K = cfg["channel_size"], cfg["kernel_size"]
        bound = 1.0 / jnp.sqrt(input_size * K)
        params["conv_w"].append(
            jax.random.uniform(k1, (C, input_size, K), jnp.float32, -bound, bound))
        params["conv_b"].append(
            jax.random.uniform(k2, (C,), jnp.float32, -bound, bound))
    Ctot = sum(cfg["channel_size"] for cfg in convs_configs)
    key, k1, k2, k3, k4, k5, k6 = jax.random.split(key, 7)
    params["bn_gamma"] = jax.random.uniform(k1, (Ctot,), jnp.float32, 0.5, 1.5)
    params["bn_beta"] = jax.random.uniform(k2, (Ctot,), jnp.float32, -0.5, 0.5)
    params["bn_mean"] = jax.random.uniform(k3, (Ctot,), jnp.float32, -0.2, 0.2)
    params["bn_var"] = jax.random.uniform(k4, (Ctot,), jnp.float32, 0.5, 1.5)
    bound = 1.0 / jnp.sqrt(Ctot)
    params["wl"] = jax.random.uniform(k5, (output_size, Ctot), jnp.float32,
                                      -bound, bound)
    params["bl"] = jax.random.uniform(k6, (output_size,), jnp.float32,
                                      -bound, bound)
    return params


if __name__ == "__main__":
    B, T, input_size, output_size = 2, 16, 8, 12
    convs_configs = [
        {"channel_size": 16, "kernel_size": 3, "padding": 1},
        {"channel_size": 16, "kernel_size": 5, "padding": 2},
        {"channel_size": 8, "kernel_size": 1, "padding": 0},
    ]

    key = jax.random.PRNGKey(0)
    key, kx = jax.random.split(key)
    x = jax.random.normal(kx, (B, T, input_size), jnp.float32)
    params = init_params(key, input_size, output_size, convs_configs)

    ref = multicnn_reference(x, params, convs_configs)

    # f32 matmul operands (all chips): tight tolerance vs. reference.
    out = multicnn_forward(x, params, convs_configs, compute_dtype=jnp.float32)
    out = jax.block_until_ready(out)
    assert out.shape == (B, T, output_size), out.shape
    assert jnp.allclose(out, ref, rtol=1e-4, atol=1e-4), \
        float(jnp.max(jnp.abs(out - ref)))

    # bf16 matmul operands, f32 accumulation (v6e/v7x fast path): loose tolerance.
    out_bf16 = multicnn_forward(x, params, convs_configs,
                                compute_dtype=jnp.bfloat16)
    out_bf16 = jax.block_until_ready(out_bf16)
    assert jnp.allclose(out_bf16, ref, rtol=5e-2, atol=5e-2), \
        float(jnp.max(jnp.abs(out_bf16 - ref)))

    print("KERNEL_OK")
</pallas_src>

<mosaic_0001>
module attributes {stable_mosaic.version = 11 : i64} {
  func.func @_multicnn_kernel(%arg0: i32, %arg1: memref<32x41xf32, #tpu.memory_space<vmem>>, %arg2: memref<41x41xf32, #tpu.memory_space<vmem>>, %arg3: memref<41x128xf32, #tpu.memory_space<vmem>>, %arg4: memref<32x128xf32, #tpu.memory_space<vmem>>) attributes {dimension_semantics = [#tpu.dimension_semantics<parallel>], iteration_bounds = array<i64: 1>, scalar_prefetch = 0 : i64, scratch_operands = 0 : i64, tpu.core_type = #tpu.core_type<tc>, window_params = [{transform_indices = @transform_0, window_bounds = array<i64: 32, 41>}, {pipeline_mode = #tpu.pipeline_mode<synchronous>, transform_indices = @transform_1, window_bounds = array<i64: 41, 41>}, {pipeline_mode = #tpu.pipeline_mode<synchronous>, transform_indices = @transform_2, window_bounds = array<i64: 41, 128>}, {transform_indices = @transform_3, window_bounds = array<i64: 32, 128>}]} {
    %c0 = arith.constant 0 : index
    %c0_0 = arith.constant 0 : index
    %0 = vector.load %arg1[%c0, %c0_0] : memref<32x41xf32, #tpu.memory_space<vmem>>, vector<32x41xf32>
    %c0_1 = arith.constant 0 : index
    %c0_2 = arith.constant 0 : index
    %1 = vector.load %arg2[%c0_1, %c0_2] : memref<41x41xf32, #tpu.memory_space<vmem>>, vector<41x41xf32>
    %cst = arith.constant dense<0.000000e+00> : vector<32x41xf32>
    %2 = tpu.matmul %0, %1, %cst {dimension_numbers = #tpu.dot_dimension_numbers<[1], [0], [0], [1], [0, 0, 1, 1], [], []>} : vector<32x41xf32>, vector<41x41xf32>, vector<32x41xf32> -> vector<32x41xf32>
    %cst_3 = arith.constant 0.000000e+00 : f32
    %3 = vector.broadcast %cst_3 : f32 to vector<32x41xf32>
    %4 = arith.maximumf %2, %3 : vector<32x41xf32>
    %c0_4 = arith.constant 0 : index
    %c0_5 = arith.constant 0 : index
    %5 = vector.load %arg3[%c0_4, %c0_5] : memref<41x128xf32, #tpu.memory_space<vmem>>, vector<41x128xf32>
    %cst_6 = arith.constant dense<0.000000e+00> : vector<32x128xf32>
    %6 = tpu.matmul %4, %5, %cst_6 {dimension_numbers = #tpu.dot_dimension_numbers<[1], [0], [0], [1], [0, 0, 1, 1], [], []>} : vector<32x41xf32>, vector<41x128xf32>, vector<32x128xf32> -> vector<32x128xf32>
    %c0_7 = arith.constant 0 : index
    %c0_8 = arith.constant 0 : index
    %7 = vector.load %arg4[%c0_7, %c0_8] : memref<32x128xf32, #tpu.memory_space<vmem>>, vector<32x128xf32>
    tpu.vector_store %arg4[%c0_7, %c0_8], %6 {strides = array<i32>} : memref<32x128xf32, #tpu.memory_space<vmem>>, vector<32x128xf32>,
    return
  }
  func.func @transform_0(%arg0: i32) -> (i32, i32) {
    %c0_i32 = arith.constant 0 : i32
    %c0_i32_0 = arith.constant 0 : i32
    return %arg0, %c0_i32 : i32, i32
  }
  func.func @transform_1(%arg0: i32) -> (i32, i32) {
    %c0_i32 = arith.constant 0 : i32
    %c0_i32_0 = arith.constant 0 : i32
    %c0_i32_1 = arith.constant 0 : i32
    return %c0_i32, %c0_i32_0 : i32, i32
  }
  func.func @transform_2(%arg0: i32) -> (i32, i32) {
    %c0_i32 = arith.constant 0 : i32
    %c0_i32_0 = arith.constant 0 : i32
    %c0_i32_1 = arith.constant 0 : i32
    return %c0_i32, %c0_i32_0 : i32, i32
  }
  func.func @transform_3(%arg0: i32) -> (i32, i32) {
    %c0_i32 = arith.constant 0 : i32
    %c0_i32_0 = arith.constant 0 : i32
    return %arg0, %c0_i32 : i32, i32
  }
}

</mosaic_0001>

<llo_original>
// kernel: tpu_custom_call.1
$region0: #{tpu_custom_call.1}
  #allocation0 [shape = 'u32[]', space=smem, size = 0x4, offset = 0x4, fixed_abs, tag = 'smem constant byte address 0x4 - core index']
  #allocation1 [shape = 'u32[144,128]{1,0:T(1,128)}', space=vmem, size = 0x12000, scoped, tag = 'internal scratch']
  %s0 = inlined_call_operand.hbm [shape: f32[32,41], index: 0, kind: input, shape index: {}]
  %s1 = inlined_call_operand.hbm [shape: f32[41,41], index: 1, kind: input, shape index: {}]
  %s2 = inlined_call_operand.hbm [shape: f32[41,128], index: 2, kind: input, shape index: {}]
  %s3 = inlined_call_operand.hbm [shape: f32[32,128], index: 3, kind: output, shape index: {}]
  %s4 = sld [smem:[#allocation0]]
  $region34: #{tpu_custom_call.1} parent=0
    _
  %s6 = ssub.s32 1, %s4
  %s7 = scalar_select 0, %s6, %s4
  $region1: #{tpu_custom_call.1} parent=0
    #allocation2 [shape = 'u8[16384]{0}', space=vmem, size = 0x4000, scoped, tag = 'input window, operand 0, single buffered']
    #allocation3 [shape = 's32[1]{0}', space=sflag, size = 0x4, scoped, tag = 'scoped memory for tpu_custom_call.1']
    #allocation4 [shape = 's32[1]{0}', space=sflag, size = 0x4, scoped, tag = 'scoped memory for tpu_custom_call.1']
    #allocation5 [shape = 'u8[24576]{0}', space=vmem, size = 0x6000, scoped, tag = 'input window, operand 1, single buffered']
    #allocation6 [shape = 's32[1]{0}', space=sflag, size = 0x4, scoped, tag = 'scoped memory for tpu_custom_call.1']
    #allocation7 [shape = 'u8[24576]{0}', space=vmem, size = 0x6000, scoped, tag = 'input window, operand 2, single buffered']
    #allocation8 [shape = 'u8[16384]{0}', space=vmem, size = 0x4000, scoped, tag = 'output window, operand 0, single buffered']
    %8 = vsyncpa [#allocation3], 0
    %9 = vsyncpa [#allocation6], 0
    %10 = vsyncpa [#allocation4], 0
    // Predicated region
    $region2: #{tpu_custom_call.1} parent=1 // pred_check
      _
    $region3: #{tpu_custom_call.1} parent=1 // pred_check_branch
      %12 = sbr.rel (0) target = $region5
    $region4: #{tpu_custom_call.1} parent=1 // pred_region
      %s14 = ssub.s32 512, 512
      %15 = vsyncadd [#allocation3], %s14
      %s16 = sshll.u32 [#allocation2], 4
      %s17 = int_to_ptr.vmem [resolvable:$true] %s16
      %22 = dma.hbm_to_vmem [thread:$0]  %s0, 512, %s17, [#allocation3], 128, 128, 8
    $region5: #{tpu_custom_call.1} parent=1 // pred_fallthru
      _
    // Predicated region
    $region6: #{tpu_custom_call.1} parent=1 // pred_check
      _
    $region7: #{tpu_custom_call.1} parent=1 // pred_check_branch
      %24 = sbr.rel (0) target = $region9
    $region8: #{tpu_custom_call.1} parent=1 // pred_region
      %s26 = ssub.s32 768, 768
      %27 = vsyncadd [#allocation6], %s26
      %s28 = sshll.u32 [#allocation5], 4
      %s29 = int_to_ptr.vmem [resolvable:$true] %s28
      %34 = dma.hbm_to_vmem [thread:$0]  %s1, 768, %s29, [#allocation6], 128, 128, 8
    $region9: #{tpu_custom_call.1} parent=1 // pred_fallthru
      _
    // Predicated region
    $region10: #{tpu_custom_call.1} parent=1 // pred_check
      _
    $region11: #{tpu_custom_call.1} parent=1 // pred_check_branch
      %36 = sbr.rel (0) target = $region13
    $region12: #{tpu_custom_call.1} parent=1 // pred_region
      %s38 = ssub.s32 768, 768
      %39 = vsyncadd [#allocation6], %s38
      %s40 = sshll.u32 [#allocation7], 4
      %s41 = int_to_ptr.vmem [resolvable:$true] %s40
      %46 = dma.hbm_to_vmem [thread:$0]  %s2, 768, %s41, [#allocation6], 128, 128, 8
    $region13: #{tpu_custom_call.1} parent=1 // pred_fallthru
      _
    // Predicated region
    $region14: #{tpu_custom_call.1} parent=1 // pred_check
      _
    $region15: #{tpu_custom_call.1} parent=1 // pred_check_branch
      %48 = sbr.rel (0) target = $region17
    $region16: #{tpu_custom_call.1} parent=1 // pred_region
      %49 = dma.done [#allocation3], 512
    $region17: #{tpu_custom_call.1} parent=1 // pred_fallthru
      _
    // Predicated region
    $region18: #{tpu_custom_call.1} parent=1 // pred_check
      _
    $region19: #{tpu_custom_call.1} parent=1 // pred_check_branch
      %51 = sbr.rel (0) target = $region21
    $region20: #{tpu_custom_call.1} parent=1 // pred_region
      %52 = dma.done [#allocation6], 768
    $region21: #{tpu_custom_call.1} parent=1 // pred_fallthru
      _
    // Predicated region
    $region22: #{tpu_custom_call.1} parent=1 // pred_check
      _
    $region23: #{tpu_custom_call.1} parent=1 // pred_check_branch
      %54 = sbr.rel (0) target = $region25
    $region24: #{tpu_custom_call.1} parent=1 // pred_region
      %55 = dma.done [#allocation6], 768
    $region25: #{tpu_custom_call.1} parent=1 // pred_fallthru
      _
    %v56 = vld [vmem:[#allocation2] sm:$0xff]
    %v57 = vld [vmem:[#allocation2 + $0x8] sm:$0xff]
    %v58 = vld [vmem:[#allocation2 + $0x10] sm:$0xff]
    %v59 = vld [vmem:[#allocation2 + $0x18] sm:$0xff]
    %v60 = vld [vmem:[#allocation5] sm:$0xff]
    %v61 = vld [vmem:[#allocation5 + $0x8] sm:$0xff]
    %v62 = vld [vmem:[#allocation5 + $0x10] sm:$0xff]
    %v63 = vld [vmem:[#allocation5 + $0x18] sm:$0xff]
    %v64 = vld [vmem:[#allocation5 + $0x20] sm:$0xff]
    %v65 = vld [vmem:[#allocation5 + $0x28] sm:$0x1]
    %vm66 = vcmask 334848
    %v68 = vsel %vm66, %v56, 0
    %v71 = vsel %vm66, %v57, 0
    %v74 = vsel %vm66, %v58, 0
    %v77 = vsel %vm66, %v59, 0
    %vm79 = vcmask 1040384
    %v81 = vsel %vm79, %v65, 0
    %83 = vmatprep.subr.mxu0 0.0
    %84 = vmatpush1.msra.mxu0 0.0
    %85 = vmatprep.subr.mxu0 0.0
    %86 = vmatpush1.msra.mxu0 0.0
    %87 = vmatprep.subr.mxu0 0.0
    %88 = vmatpush1.msra.mxu0 0.0
    %89 = vmatprep.subr.mxu0 0.0
    %90 = vmatpush1.msra.mxu0 0.0
    %91 = vmatprep.subr.mxu0 0.0
    %92 = vmatpush1.msra.mxu0 0.0
    %93 = vmatprep.subr.mxu0 0.0
    %94 = vmatpush1.msra.mxu0 0.0
    %95 = vmatprep.subr.mxu0 0.0
    %96 = vmatpush1.msra.mxu0 0.0
    %97 = vmatprep.subr.mxu0 0.0
    %98 = vmatpush1.msra.mxu0 0.0
    %99 = vmatprep.subr.mxu0 0.0
    %100 = vmatpush1.msra.mxu0 0.0
    %101 = vmatprep.subr.mxu0 0.0
    %102 = vmatpush1.msra.mxu0 0.0
    %103 = vmatprep.subr.mxu0 0.0
    %104 = vmatpush1.msra.mxu0 %v81
    %105 = vmatprep.subr.mxu0 0.0
    %106 = vmatpush1.msra.mxu0 %v64
    %107 = vmatprep.subr.mxu0 0.0
    %108 = vmatpush1.msra.mxu0 %v63
    %109 = vmatprep.subr.mxu0 0.0
    %110 = vmatpush1.msra.mxu0 %v62
    %111 = vmatprep.subr.mxu0 0.0
    %112 = vmatpush1.msra.mxu0 %v61
    %113 = vmatprep.subr.mxu0 0.0
    %114 = vmatpush1.msra.mxu0 %v60
    %115 = vmatprep.subr.mxu0 0.0
    %116 = vmatpush2.msra.mxu0 0.0
    %117 = vmatprep.subr.mxu0 0.0
    %118 = vmatpush2.msra.mxu0 0.0
    %119 = vmatprep.subr.mxu0 0.0
    %120 = vmatpush2.msra.mxu0 0.0
    %121 = vmatprep.subr.mxu0 0.0
    %122 = vmatpush2.msra.mxu0 0.0
    %123 = vmatprep.subr.mxu0 0.0
    %124 = vmatpush2.msra.mxu0 0.0
    %125 = vmatprep.subr.mxu0 0.0
    %126 = vmatpush2.msra.mxu0 0.0
    %127 = vmatprep.subr.mxu0 0.0
    %128 = vmatpush2.msra.mxu0 0.0
    %129 = vmatprep.subr.mxu0 0.0
    %130 = vmatpush2.msra.mxu0 0.0
    %131 = vmatprep.subr.mxu0 0.0
    %132 = vmatpush2.msra.mxu0 0.0
    %133 = vmatprep.subr.mxu0 0.0
    %134 = vmatpush2.msra.mxu0 0.0
    %135 = vmatprep.subr.mxu0 0.0
    %136 = vmatpush2.msra.mxu0 0.0
    %137 = vmatprep.subr.mxu0 0.0
    %138 = vmatpush2.msra.mxu0 0.0
    %139 = vmatprep.subr.mxu0 0.0
    %140 = vmatpush2.msra.mxu0 0.0
    %141 = vmatprep.subr.mxu0 0.0
    %142 = vmatpush2.msra.mxu0 0.0
    %143 = vmatprep.subr.mxu0 0.0
    %144 = vmatpush2.msra.mxu0 0.0
    %145 = vmatprep.subr.mxu0 0.0
    %146 = vmatpush2.msra.mxu0 0.0
    %147 = vmatprep.mubr.f32.mxu0 0.0
    %148 = vmatmul.mubr.f32.gmra.mxu0 %v68
    %v149 = vpop.f32.mrf.mxu0
    %v150 = vadd.f32 0.0, %v149
    %v151 = vpop.f32.mrf.mxu0
    %152 = vmatprep.mubr.f32.mxu0 0.0
    %153 = vmatmul.mubr.f32.gmra.mxu0 %v71
    %v154 = vpop.f32.mrf.mxu0
    %v155 = vadd.f32 0.0, %v154
    %v156 = vpop.f32.mrf.mxu0
    %157 = vmatprep.mubr.f32.mxu0 0.0
    %158 = vmatmul.mubr.f32.gmra.mxu0 %v74
    %v159 = vpop.f32.mrf.mxu0
    %v160 = vadd.f32 0.0, %v159
    %v161 = vpop.f32.mrf.mxu0
    %162 = vmatprep.mubr.f32.mxu0 0.0
    %163 = vmatmul.mubr.f32.gmra.mxu0 %v77
    %v164 = vpop.f32.mrf.mxu0
    %v165 = vadd.f32 0.0, %v164
    %v166 = vpop.f32.mrf.mxu0
    %167 = vdwg.mxu0
    %v168 = vmax.f32 %v150, 0.0
    %v169 = vmax.f32 %v155, 0.0
    %v170 = vmax.f32 %v160, 0.0
    %v171 = vmax.f32 %v165, 0.0
    %v172 = vld [vmem:[#allocation7] sm:$0xff]
    %v173 = vld [vmem:[#allocation7 + $0x8] sm:$0xff]
    %v174 = vld [vmem:[#allocation7 + $0x10] sm:$0xff]
    %v175 = vld [vmem:[#allocation7 + $0x18] sm:$0xff]
    %v176 = vld [vmem:[#allocation7 + $0x20] sm:$0xff]
    %v177 = vld [vmem:[#allocation7 + $0x28] sm:$0x1]
    %v179 = vsel %vm66, %v168, 0
    %v182 = vsel %vm66, %v169, 0
    %v185 = vsel %vm66, %v170, 0
    %v188 = vsel %vm66, %v171, 0
    %v191 = vsel %vm79, %v177, 0
    %193 = vmatprep.subr.mxu0 0.0
    %194 = vmatpush1.msra.mxu0 0.0
    %195 = vmatprep.subr.mxu0 0.0
    %196 = vmatpush1.msra.mxu0 0.0
    %197 = vmatprep.subr.mxu0 0.0
    %198 = vmatpush1.msra.mxu0 0.0
    %199 = vmatprep.subr.mxu0 0.0
    %200 = vmatpush1.msra.mxu0 0.0
    %201 = vmatprep.subr.mxu0 0.0
    %202 = vmatpush1.msra.mxu0 0.0
    %203 = vmatprep.subr.mxu0 0.0
    %204 = vmatpush1.msra.mxu0 0.0
    %205 = vmatprep.subr.mxu0 0.0
    %206 = vmatpush1.msra.mxu0 0.0
    %207 = vmatprep.subr.mxu0 0.0
    %208 = vmatpush1.msra.mxu0 0.0
    %209 = vmatprep.subr.mxu0 0.0
    %210 = vmatpush1.msra.mxu0 0.0
    %211 = vmatprep.subr.mxu0 0.0
    %212 = vmatpush1.msra.mxu0 0.0
    %213 = vmatprep.subr.mxu0 0.0
    %214 = vmatpush1.msra.mxu0 %v191
    %215 = vmatprep.subr.mxu0 0.0
    %216 = vmatpush1.msra.mxu0 %v176
    %217 = vmatprep.subr.mxu0 0.0
    %218 = vmatpush1.msra.mxu0 %v175
    %219 = vmatprep.subr.mxu0 0.0
    %220 = vmatpush1.msra.mxu0 %v174
    %221 = vmatprep.subr.mxu0 0.0
    %222 = vmatpush1.msra.mxu0 %v173
    %223 = vmatprep.subr.mxu0 0.0
    %224 = vmatpush1.msra.mxu0 %v172
    %225 = vmatprep.subr.mxu0 0.0
    %226 = vmatpush2.msra.mxu0 0.0
    %227 = vmatprep.subr.mxu0 0.0
    %228 = vmatpush2.msra.mxu0 0.0
    %229 = vmatprep.subr.mxu0 0.0
    %230 = vmatpush2.msra.mxu0 0.0
    %231 = vmatprep.subr.mxu0 0.0
    %232 = vmatpush2.msra.mxu0 0.0
    %233 = vmatprep.subr.mxu0 0.0
    %234 = vmatpush2.msra.mxu0 0.0
    %235 = vmatprep.subr.mxu0 0.0
    %236 = vmatpush2.msra.mxu0 0.0
    %237 = vmatprep.subr.mxu0 0.0
    %238 = vmatpush2.msra.mxu0 0.0
    %239 = vmatprep.subr.mxu0 0.0
    %240 = vmatpush2.msra.mxu0 0.0
    %241 = vmatprep.subr.mxu0 0.0
    %242 = vmatpush2.msra.mxu0 0.0
    %243 = vmatprep.subr.mxu0 0.0
    %244 = vmatpush2.msra.mxu0 0.0
    %245 = vmatprep.subr.mxu0 0.0
    %246 = vmatpush2.msra.mxu0 0.0
    %247 = vmatprep.subr.mxu0 0.0
    %248 = vmatpush2.msra.mxu0 0.0
    %249 = vmatprep.subr.mxu0 0.0
    %250 = vmatpush2.msra.mxu0 0.0
    %251 = vmatprep.subr.mxu0 0.0
    %252 = vmatpush2.msra.mxu0 0.0
    %253 = vmatprep.subr.mxu0 0.0
    %254 = vmatpush2.msra.mxu0 0.0
    %255 = vmatprep.subr.mxu0 0.0
    %256 = vmatpush2.msra.mxu0 0.0
    %257 = vmatprep.mubr.f32.mxu0 0.0
    %258 = vmatmul.mubr.f32.gmra.mxu0 %v179
    %v259 = vpop.f32.mrf.mxu0
    %v260 = vadd.f32 0.0, %v259
    %v261 = vpop.f32.mrf.mxu0
    %262 = vmatprep.mubr.f32.mxu0 0.0
    %263 = vmatmul.mubr.f32.gmra.mxu0 %v182
    %v264 = vpop.f32.mrf.mxu0
    %v265 = vadd.f32 0.0, %v264
    %v266 = vpop.f32.mrf.mxu0
    %267 = vmatprep.mubr.f32.mxu0 0.0
    %268 = vmatmul.mubr.f32.gmra.mxu0 %v185
    %v269 = vpop.f32.mrf.mxu0
    %v270 = vadd.f32 0.0, %v269
    %v271 = vpop.f32.mrf.mxu0
    %272 = vmatprep.mubr.f32.mxu0 0.0
    %273 = vmatmul.mubr.f32.gmra.mxu0 %v188
    %v274 = vpop.f32.mrf.mxu0
    %v275 = vadd.f32 0.0, %v274
    %v276 = vpop.f32.mrf.mxu0
    %277 = vdwg.mxu0
    %278 = vst [vmem:[#allocation8] sm:$0xff] %v260
    %279 = vst [vmem:[#allocation8 + $0x8] sm:$0xff] %v265
    %280 = vst [vmem:[#allocation8 + $0x10] sm:$0xff] %v270
    %281 = vst [vmem:[#allocation8 + $0x18] sm:$0xff] %v275
    // Predicated region
    $region26: #{tpu_custom_call.1} parent=1 // pred_check
      _
    $region27: #{tpu_custom_call.1} parent=1 // pred_check_branch
      %283 = sbr.rel (0) target = $region29
    $region28: #{tpu_custom_call.1} parent=1 // pred_region
      %s285 = ssub.s32 512, 512
      %286 = vsyncadd [#allocation4], %s285
      %s287 = sshll.u32 [#allocation8], 4
      %s288 = int_to_ptr.vmem [resolvable:$true] %s287
      %293 = dma.vmem_to_hbm [thread:$0]  %s288, 512, %s3, [#allocation4], 128, 128, 8
    $region29: #{tpu_custom_call.1} parent=1 // pred_fallthru
      _
    // Predicated region
    $region30: #{tpu_custom_call.1} parent=1 // pred_check
      _
    $region31: #{tpu_custom_call.1} parent=1 // pred_check_branch
      %295 = sbr.rel (0) target = $region33
    $region32: #{tpu_custom_call.1} parent=1 // pred_region
      %296 = dma.done [#allocation4], 512
    $region33: #{tpu_custom_call.1} parent=1 // pred_fallthru
      _
    %297 = vsyncpa [#allocation3], 1
    %298 = vsyncpa [#allocation6], 1
    %299 = vsyncpa [#allocation4], 1

</llo_original>
